<compile_context>
chip_gen: v6e
topology: v6e:2x2x1
jax: 0.10.0
libtpu: 0.0.40
codegen_flags: <defaults>
</compile_context>

<pallas_src>
import functools

import jax
import jax.numpy as jnp
from jax.experimental import pallas as pl
from jax.experimental.pallas import tpu as pltpu

# Loss hyper-parameters (deterministic, matches the module defaults).
N_CLASS = 4
LMBDA = 0.5
M_POSITIVE = 0.9
M_NEGATIVE = 0.1
RECON_LOSS_SCALE = 0.0005

_LANE = 128
_SUBLANE = 8
_RECON_BLOCK_ROWS = 512  # 512*128*4B = 256 KiB per block per input


def _round_up(x, m):
    return ((x + m - 1) // m) * m


# ---------------------------------------------------------------------------
# In-kernel margin-loss math (shared by both kernels).
#   v_t:         (D_pad, BC_pad) f32, column j <-> flat index j = b*C + c (padded cols are 0).
#   flatpos_ref: (B,) int32 SMEM ref, flatpos[b] = b*C + labels[b].
# Padded lanes contribute exactly 0 (vn=0 -> present gated by onehot=0, absent relu(-m_neg)=0).
# ---------------------------------------------------------------------------
def _margin_loss_sum(v_t, flatpos_ref, *, batch, lmbda, m_pos, m_neg):
    bc_pad = v_t.shape[1]
    vn = jnp.sqrt(jnp.sum(v_t * v_t, axis=0, keepdims=True))          # (1, BC_pad)
    present = jnp.maximum(m_pos - vn, 0.0) ** 2                        # relu(m+ - |v|)^2
    absent = jnp.maximum(vn - m_neg, 0.0) ** 2                         # relu(|v| - m-)^2
    lane = jax.lax.broadcasted_iota(jnp.int32, (1, bc_pad), 1)

    def body(b, acc):
        return acc + (lane == flatpos_ref[b]).astype(jnp.float32)

    onehot = jax.lax.fori_loop(0, batch, body, jnp.zeros((1, bc_pad), jnp.float32))
    loss = onehot * present + lmbda * (1.0 - onehot) * absent
    return jnp.sum(loss)


# ---------------------------------------------------------------------------
# Kernels
# ---------------------------------------------------------------------------
def _margin_kernel(flatpos_ref, v_ref, out_ref, *, batch, lmbda, m_pos, m_neg, inv_batch):
    v = v_ref[...].astype(jnp.float32)
    out_ref[0, 0] = (
        _margin_loss_sum(v, flatpos_ref, batch=batch, lmbda=lmbda, m_pos=m_pos, m_neg=m_neg)
        * inv_batch
    )


def _fused_kernel(flatpos_ref, v_ref, img_ref, rec_ref, out_ref, acc_ref, *,
                  batch, lmbda, m_pos, m_neg, inv_batch, recon_factor):
    step = pl.program_id(0)

    @pl.when(step == 0)
    def _():
        acc_ref[...] = jnp.zeros_like(acc_ref)

    # Streaming sum of squared differences (cast once per block; padded rows are zero).
    d = rec_ref[...].astype(jnp.float32) - img_ref[...].astype(jnp.float32)
    acc_ref[...] += jnp.sum(d * d, axis=0, keepdims=True)              # (1, 128) sublane reduce

    @pl.when(step == pl.num_programs(0) - 1)
    def _():
        margin = (
            _margin_loss_sum(v_ref[...].astype(jnp.float32), flatpos_ref,
                             batch=batch, lmbda=lmbda, m_pos=m_pos, m_neg=m_neg)
            * inv_batch
        )
        recon = jnp.sum(acc_ref[...]) * recon_factor                   # (scale / n_elem) baked in
        out_ref[0, 0] = margin + recon


# ---------------------------------------------------------------------------
# Wrapper-side layout plumbing (no dtype casts, only reshape/transpose/pad).
# ---------------------------------------------------------------------------
def _prep_margin_inputs(v, labels):
    B, C, D = v.shape
    v_t = jnp.transpose(v.reshape(B * C, D), (1, 0))                  # (D, B*C): B*C on lanes
    d_pad = _round_up(D, _SUBLANE)
    bc_pad = _round_up(B * C, _LANE)
    v_t = jnp.pad(v_t, ((0, d_pad - D), (0, bc_pad - B * C)))
    flatpos = labels.astype(jnp.int32) + jnp.arange(B, dtype=jnp.int32) * C
    return v_t, flatpos


def _prep_recon_inputs(images, reconstructed_images):
    n_elem = int(images.size)
    rows = (n_elem + _LANE - 1) // _LANE
    if rows <= _RECON_BLOCK_ROWS:
        block_rows = _round_up(max(rows, 1), _SUBLANE)
    else:
        block_rows = _RECON_BLOCK_ROWS
    rows_pad = _round_up(rows, block_rows)
    pad = rows_pad * _LANE - n_elem

    def to_slab(x):
        flat = x.reshape(-1)
        if pad:
            flat = jnp.pad(flat, (0, pad))
        return flat.reshape(rows_pad, _LANE)

    num_chunks = rows_pad // block_rows
    return to_slab(images), to_slab(reconstructed_images), block_rows, num_chunks, n_elem


_COMPILER_PARAMS = pltpu.CompilerParams(
    dimension_semantics=("arbitrary",),
    vmem_limit_bytes=32 * 1024 * 1024,
)


def margin_loss(v, labels, *, lmbda=LMBDA, m_pos=M_POSITIVE, m_neg=M_NEGATIVE):
    B = v.shape[0]
    v_t, flatpos = _prep_margin_inputs(v, labels)
    kernel = functools.partial(_margin_kernel, batch=B, lmbda=lmbda, m_pos=m_pos,
                               m_neg=m_neg, inv_batch=1.0 / B)
    grid_spec = pltpu.PrefetchScalarGridSpec(
        num_scalar_prefetch=1,
        grid=(1,),
        in_specs=[pl.BlockSpec(v_t.shape, lambda i, fp: (0, 0))],
        out_specs=pl.BlockSpec((1, 1), lambda i, fp: (0, 0),
                               memory_space=pltpu.MemorySpace.SMEM),
    )
    out = pl.pallas_call(
        kernel,
        out_shape=jax.ShapeDtypeStruct((1, 1), jnp.float32),
        grid_spec=grid_spec,
        compiler_params=_COMPILER_PARAMS,
    )(flatpos, v_t)
    return out[0, 0]


def capsnet_loss_fused(v, labels, images, reconstructed_images, *,
                       lmbda=LMBDA, m_pos=M_POSITIVE, m_neg=M_NEGATIVE,
                       recon_scale=RECON_LOSS_SCALE):
    B = v.shape[0]
    v_t, flatpos = _prep_margin_inputs(v, labels)
    img2d, rec2d, block_rows, num_chunks, n_elem = _prep_recon_inputs(
        images, reconstructed_images)
    kernel = functools.partial(
        _fused_kernel, batch=B, lmbda=lmbda, m_pos=m_pos, m_neg=m_neg,
        inv_batch=1.0 / B, recon_factor=recon_scale / n_elem)
    grid_spec = pltpu.PrefetchScalarGridSpec(
        num_scalar_prefetch=1,
        grid=(num_chunks,),
        in_specs=[
            pl.BlockSpec(v_t.shape, lambda i, fp: (0, 0)),                 # resident across grid
            pl.BlockSpec((block_rows, _LANE), lambda i, fp: (i, 0)),       # images chunk
            pl.BlockSpec((block_rows, _LANE), lambda i, fp: (i, 0)),       # reconstruction chunk
        ],
        out_specs=pl.BlockSpec((1, 1), lambda i, fp: (0, 0),
                               memory_space=pltpu.MemorySpace.SMEM),
        scratch_shapes=[pltpu.VMEM((1, _LANE), jnp.float32)],
    )
    out = pl.pallas_call(
        kernel,
        out_shape=jax.ShapeDtypeStruct((1, 1), jnp.float32),
        grid_spec=grid_spec,
        compiler_params=_COMPILER_PARAMS,
    )(flatpos, v_t, img2d, rec2d)
    return out[0, 0]


def capsnet_loss(v, labels, images=None, reconstructed_images=None):
    """Forward pass of CapsNetLoss."""
    if images is not None and reconstructed_images is not None:
        return capsnet_loss_fused(v, labels, images, reconstructed_images)
    return margin_loss(v, labels)


if __name__ == "__main__":
    key = jax.random.PRNGKey(0)
    k_v, k_lab, k_img, k_rec = jax.random.split(key, 4)

    B, C, D = 2, N_CLASS, 16            # (batch, n_class, capsule_dim)
    CH, H, W = 1, 16, 16                # small NCHW images

    v = jax.random.uniform(k_v, (B, C, D), dtype=jnp.float32)
    labels = jax.random.randint(k_lab, (B,), 0, C, dtype=jnp.int32)
    images = jax.random.uniform(k_img, (B, CH, H, W), dtype=jnp.float32)
    recon = jax.random.uniform(k_rec, (B, CH, H, W), dtype=jnp.float32)

    # margin-only path
    loss_margin_only = capsnet_loss(v, labels)
    # margin + reconstruction path (single fused kernel)
    loss_full = capsnet_loss(v, labels, images, recon)

    jax.block_until_ready(loss_margin_only)
    jax.block_until_ready(loss_full)

    # Reference check in plain JAX (same math) to sanity-verify the kernels.
    vn = jnp.linalg.norm(v, axis=-1)
    pres = jnp.maximum(M_POSITIVE - vn, 0.0) ** 2
    absn = jnp.maximum(vn - M_NEGATIVE, 0.0) ** 2
    oh = jax.nn.one_hot(labels, C, dtype=jnp.float32)
    ref_margin = jnp.mean(jnp.sum(oh * pres + LMBDA * (1 - oh) * absn, axis=1))
    ref_recon = jnp.mean((recon - images) ** 2) * RECON_LOSS_SCALE
    assert jnp.allclose(loss_margin_only, ref_margin, rtol=1e-5, atol=1e-6)
    assert jnp.allclose(loss_full, ref_margin + ref_recon, rtol=1e-5, atol=1e-6)

    print("KERNEL_OK")
</pallas_src>

<mosaic_0001>
module attributes {stable_mosaic.version = 11 : i64} {
  func.func @_margin_kernel(%arg0: i32, %arg1: memref<2xi32, #tpu.memory_space<smem>>, %arg2: memref<16x128xf32, #tpu.memory_space<vmem>>, %arg3: memref<1x1xf32, #tpu.memory_space<smem>>) attributes {dimension_semantics = [#tpu.dimension_semantics<arbitrary>], iteration_bounds = array<i64: 1>, scalar_prefetch = 1 : i64, scratch_operands = 0 : i64, tpu.core_type = #tpu.core_type<tc>, window_params = [{pipeline_mode = #tpu.pipeline_mode<synchronous>, transform_indices = @transform_0, window_bounds = array<i64: 16, 128>}, {transform_indices = @transform_1, window_bounds = array<i64: 1, 1>}]} {
    %c0 = arith.constant 0 : index
    %c0_0 = arith.constant 0 : index
    %0 = vector.load %arg2[%c0, %c0_0] : memref<16x128xf32, #tpu.memory_space<vmem>>, vector<16x128xf32>
    %1 = arith.mulf %0, %0 : vector<16x128xf32>
    %cst = arith.constant dense<0.000000e+00> : vector<128xf32>
    %2 = vector.multi_reduction <add>, %1, %cst [0] : vector<16x128xf32> to vector<128xf32>
    %3 = vector.shape_cast %2 : vector<128xf32> to vector<1x128xf32>
    %4 = math.sqrt %3 : vector<1x128xf32>
    %cst_1 = arith.constant 0.899999976 : f32
    %5 = vector.broadcast %cst_1 : f32 to vector<1x128xf32>
    %6 = arith.subf %5, %4 : vector<1x128xf32>
    %cst_2 = arith.constant 0.000000e+00 : f32
    %7 = vector.broadcast %cst_2 : f32 to vector<1x128xf32>
    %8 = arith.maximumf %6, %7 : vector<1x128xf32>
    %9 = arith.mulf %8, %8 : vector<1x128xf32>
    %cst_3 = arith.constant 1.000000e-01 : f32
    %10 = vector.broadcast %cst_3 : f32 to vector<1x128xf32>
    %11 = arith.subf %4, %10 : vector<1x128xf32>
    %cst_4 = arith.constant 0.000000e+00 : f32
    %12 = vector.broadcast %cst_4 : f32 to vector<1x128xf32>
    %13 = arith.maximumf %11, %12 : vector<1x128xf32>
    %14 = arith.mulf %13, %13 : vector<1x128xf32>
    %15 = tpu.iota {dimensions = array<i32: 1>} : vector<1x128xi32>
    %cst_5 = arith.constant 0.000000e+00 : f32
    %16 = vector.broadcast %cst_5 : f32 to vector<1x128xf32>
    %c0_i32 = arith.constant 0 : i32
    %c2_i32 = arith.constant 2 : i32
    %17 = arith.addi %c0_i32, %c2_i32 : i32
    %c1_i32 = arith.constant 1 : i32
    %18 = scf.for %arg4 = %c0_i32 to %17 step %c1_i32 iter_args(%arg5 = %16) -> (vector<1x128xf32>)  : i32 {
      %32 = arith.index_cast %arg4 : i32 to index
      %33 = memref.load %arg1[%32] : memref<2xi32, #tpu.memory_space<smem>>
      %34 = vector.broadcast %33 : i32 to vector<1x128xi32>
      %35 = arith.cmpi eq, %15, %34 : vector<1x128xi32>
      %36 = arith.extui %35 : vector<1x128xi1> to vector<1x128xi32>
      %37 = arith.sitofp %36 : vector<1x128xi32> to vector<1x128xf32>
      %38 = arith.addf %arg5, %37 : vector<1x128xf32>
      scf.yield %38 : vector<1x128xf32>
    }
    %c2_i32_6 = arith.constant 2 : i32
    %19 = arith.mulf %18, %9 : vector<1x128xf32>
    %cst_7 = arith.constant 1.000000e+00 : f32
    %20 = vector.broadcast %cst_7 : f32 to vector<1x128xf32>
    %21 = arith.subf %20, %18 : vector<1x128xf32>
    %cst_8 = arith.constant 5.000000e-01 : f32
    %22 = vector.broadcast %cst_8 : f32 to vector<1x128xf32>
    %23 = arith.mulf %22, %21 : vector<1x128xf32>
    %24 = arith.mulf %23, %14 : vector<1x128xf32>
    %25 = arith.addf %19, %24 : vector<1x128xf32>
    %26 = vector.shape_cast %25 : vector<1x128xf32> to vector<1x1x128xf32>
    %cst_9 = arith.constant dense<0.000000e+00> : vector<1xf32>
    %27 = vector.multi_reduction <add>, %26, %cst_9 [1, 2] : vector<1x1x128xf32> to vector<1xf32>
    %28 = vector.shape_cast %27 : vector<1xf32> to vector<1x1x1xf32>
    %29 = vector.extract %28[0, 0, 0] : f32 from vector<1x1x1xf32>
    %cst_10 = arith.constant 5.000000e-01 : f32
    %30 = arith.mulf %29, %cst_10 : f32
    %c0_11 = arith.constant 0 : index
    %c0_12 = arith.constant 0 : index
    %31 = memref.load %arg3[%c0_11, %c0_12] : memref<1x1xf32, #tpu.memory_space<smem>>
    memref.store %30, %arg3[%c0_11, %c0_12] : memref<1x1xf32, #tpu.memory_space<smem>>
    return
  }
  func.func @transform_0(%arg0: i32, %arg1: memref<2xi32, #tpu.memory_space<smem>>) -> (i32, i32) {
    %c0_i32 = arith.constant 0 : i32
    %c0_i32_0 = arith.constant 0 : i32
    %c0_i32_1 = arith.constant 0 : i32
    return %c0_i32, %c0_i32_0 : i32, i32
  }
  func.func @transform_1(%arg0: i32, %arg1: memref<2xi32, #tpu.memory_space<smem>>) -> (i32, i32) {
    %c0_i32 = arith.constant 0 : i32
    %c0_i32_0 = arith.constant 0 : i32
    %c0_i32_1 = arith.constant 0 : i32
    return %c0_i32, %c0_i32_0 : i32, i32
  }
}

</mosaic_0001>

<llo_original>
// kernel: tpu_custom_call.1
$region0: #{tpu_custom_call.1}
  #allocation0 [shape = 'u32[]', space=smem, size = 0x4, offset = 0x4, fixed_abs, tag = 'smem constant byte address 0x4 - core index']
  #allocation1 [shape = 'u32[144,128]{1,0:T(1,128)}', space=vmem, size = 0x12000, scoped, tag = 'internal scratch']
  #allocation2 [shape = 's32[1]{0}', space=sflag, size = 0x4, scoped, tag = 'scoped memory for tpu_custom_call.1']
  #allocation3 [shape = 'u8[512]{0}', space=smem, size = 0x200, scoped, tag = 'prefetched SMEM operand 0']
  %s0 = inlined_call_operand.hbm [shape: s32[2], index: 0, kind: input, shape index: {}]
  %s1 = inlined_call_operand.hbm [shape: f32[16,128], index: 1, kind: input, shape index: {}]
  %s2 = inlined_call_operand.hbm [shape: f32[1,1], index: 2, kind: output, shape index: {}]
  %s3 = sld [smem:[#allocation0]]
  $region25: #{tpu_custom_call.1} parent=0
    _
  %s5 = ssub.s32 1, %s3
  %s6 = scalar_select 0, %s5, %s3
  %8 = dma.hbm_to_smem %s0, 16, [#allocation3], [#allocation2]
  %9 = dma.done [#allocation2], 16
  %10 = sfence
  $region1: #{tpu_custom_call.1} parent=0
    #allocation4 [shape = 'u8[8192]{0}', space=vmem, size = 0x2000, scoped, tag = 'input window, operand 1, single buffered']
    #allocation5 [shape = 's32[1]{0}', space=sflag, size = 0x4, scoped, tag = 'scoped memory for tpu_custom_call.1']
    #allocation6 [shape = 's32[1]{0}', space=sflag, size = 0x4, scoped, tag = 'scoped memory for tpu_custom_call.1']
    #allocation7 [shape = 'u8[512]{0}', space=smem, size = 0x200, scoped, tag = 'output window, operand 0, single buffered']
    %11 = vsyncpa [#allocation5], 0
    %12 = vsyncpa [#allocation6], 0
    // Predicated region
    $region2: #{tpu_custom_call.1} parent=1 // pred_check
      _
    $region3: #{tpu_custom_call.1} parent=1 // pred_check_branch
      %14 = sbr.rel (0) target = $region5
    $region4: #{tpu_custom_call.1} parent=1 // pred_region
      %s16 = ssub.s32 256, 256
      %17 = vsyncadd [#allocation5], %s16
      %s18 = sshll.u32 [#allocation4], 4
      %s19 = int_to_ptr.vmem [resolvable:$true] %s18
      %24 = dma.hbm_to_vmem [thread:$0]  %s1, 256, %s19, [#allocation5], 128, 128, 8
    $region5: #{tpu_custom_call.1} parent=1 // pred_fallthru
      _
    // Predicated region
    $region6: #{tpu_custom_call.1} parent=1 // pred_check
      _
    $region7: #{tpu_custom_call.1} parent=1 // pred_check_branch
      %26 = sbr.rel (0) target = $region9
    $region8: #{tpu_custom_call.1} parent=1 // pred_region
      %27 = dma.done [#allocation5], 256
    $region9: #{tpu_custom_call.1} parent=1 // pred_fallthru
      _
    %v28 = vld [vmem:[#allocation4] sm:$0xff]
    %v29 = vld [vmem:[#allocation4 + $0x8] sm:$0xff]
    %v30 = vmul.f32 %v28, %v28
    %v31 = vmul.f32 %v29, %v29
    %v32 = vadd.f32 %v30, %v31
    %v33 = vrot.slane %v32, 4
    %v34 = vadd.f32 %v32, %v33
    %v35 = vrot.slane %v34, 2
    %v36 = vadd.f32 %v34, %v35
    %v37 = vrot.slane %v36, 1
    %v38 = vadd.f32 %v36, %v37
    %v39 = vrsqrt.pop %v38
    %v40 = vmul.f32 %v38, %v39
    %vm41 = vcmp.eq.f32.partialorder %v38, inf
    %v42 = vsel %vm41, %v38, %v40
    %vm43 = vcmp.eq.f32.partialorder %v38, 0.0
    %v44 = vand.u32 %v38, 2147483648
    %v45 = vsel %vm43, %v44, %v42
    %v46 = vsub.f32 0.9, %v45
    %v47 = vmax.f32 %v46, 0.0
    %v48 = vmul.f32 %v47, %v47
    %v49 = vsub.f32 %v45, 0.1
    %v50 = vmax.f32 %v49, 0.0
    %v51 = vmul.f32 %v50, %v50
    %v52 = vlaneseq
    %v53 = vand.u32 %v52, 127
    loop: start=0, step=1, limit=2
    $region10: #{tpu_custom_call.1} parent=1 // loop_pre_header
      _
    $region11: #{tpu_custom_call.1} parent=1 // loop_header
      %s55 = sphi 0, %s59
      %p56 = scmp.ge.s32.totalorder %s55, 2
      %v60 = vphi 0.0, %v66
    $region12: #{tpu_custom_call.1} parent=1 // loop_header_branch
      %58 = sbr.rel (%p56) target = $region16
    $region13: #{tpu_custom_call.1} parent=1 // loop_body
      %s61 = sld [smem:[#allocation3 + %s55]]
      %v62 = vstv %s61
      %vm63 = vcmp.eq.s32.totalorder %v53, %v62
      %v64 = vsel %vm63, 1, 0
      %v65 = vcvt.s32.f32 %v64
      %v66 = vadd.f32 %v60, %v65
    $region14: #{tpu_custom_call.1} parent=1 // loop_footer
      %s59 = sadd.s32 1, %s55
    $region15: #{tpu_custom_call.1} parent=1 // loop_footer_branch
      %54 = sbr.rel target = $region11
    $region16: #{tpu_custom_call.1} parent=1 // loop_exit
      _
    %v67 = vmul.f32 %v60, %v48
    %v68 = vsub.f32 1.0, %v60
    %v69 = vmul.f32 %v68, 0.5
    %v70 = vmul.f32 %v69, %v51
    %v71 = vadd.f32 %v67, %v70
    %vm72 = vcmask 1040384
    %v73 = vsel %vm72, %v71, 0.0
    %74 = vadd.xlane.f32.xlu0 %v73
    %v75 = vpop.xlane.xlu0 %74
    %v76 = vrot.slane %v75, 4
    %v77 = vadd.f32 %v75, %v76
    %v78 = vrot.slane %v77, 2
    %v79 = vadd.f32 %v77, %v78
    %v80 = vrot.slane %v79, 1
    %v81 = vadd.f32 %v79, %v80
    %s82 = vtos %v81
    %s83 = smul.f32 %s82, 0.5
    %s84 = scalar_lea.smem [#allocation7], 0
    %85 = sst [smem:[%s84]] %s83
    // Predicated region
    $region17: #{tpu_custom_call.1} parent=1 // pred_check
      _
    $region18: #{tpu_custom_call.1} parent=1 // pred_check_branch
      %87 = sbr.rel (0) target = $region20
    $region19: #{tpu_custom_call.1} parent=1 // pred_region
      %s89 = ssub.s32 16, 16
      %90 = vsyncadd [#allocation6], %s89
      %93 = dma.smem_to_hbm [#allocation7], 16, %s2, [#allocation6]
    $region20: #{tpu_custom_call.1} parent=1 // pred_fallthru
      _
    // Predicated region
    $region21: #{tpu_custom_call.1} parent=1 // pred_check
      _
    $region22: #{tpu_custom_call.1} parent=1 // pred_check_branch
      %95 = sbr.rel (0) target = $region24
    $region23: #{tpu_custom_call.1} parent=1 // pred_region
      %96 = dma.done [#allocation6], 16
    $region24: #{tpu_custom_call.1} parent=1 // pred_fallthru
      _
    %97 = sfence
    %98 = vsyncpa [#allocation5], 1
    %99 = vsyncpa [#allocation6], 1

</llo_original>
